<compile_context>
chip_gen: v7x
topology: tpu7x:2x2x1
jax: 0.10.0
libtpu: 0.0.40
codegen_flags: <defaults>
</compile_context>

<pallas_src>
import math
import functools

import jax
import jax.numpy as jnp
from jax import lax
from jax.experimental import pallas as pl
from jax.experimental.pallas import tpu as pltpu


def arcface_kernel(x_ref, w2t_ref, b2_ref, wnt_ref, y_ref, out_ref, xpad_ref,
                   *, s, cos_m, sin_m, th, mm, easy_margin, eps, k_valid):
    tb, k_pad = xpad_ref.shape

    # ---- stage the raw f32 activation tile into a K-aligned VMEM scratch (zero tail) so the
    #      MXU contraction runs on a fully 128-aligned K with guaranteed-zero padding ----
    xpad_ref[:, :k_valid] = x_ref[...]
    if k_pad > k_valid:
        # Unconditional (cheap) so it is correct even when grid steps are split across cores.
        xpad_ref[:, k_valid:] = jnp.zeros((tb, k_pad - k_valid), jnp.float32)

    # ---- fc2: x @ W2t + b2 -> (TB, 256); bf16 MXU operands, f32 accumulation ----
    feat = jnp.dot(xpad_ref[...].astype(jnp.bfloat16), w2t_ref[...],
                   preferred_element_type=jnp.float32) + b2_ref[...]

    # ---- F.normalize(feat, dim=1): feat / max(||feat||, eps)  (rsqrt-multiply, EUP slot) ----
    sumsq = jnp.sum(feat * feat, axis=-1, keepdims=True)
    feat_n = feat * lax.rsqrt(jnp.maximum(sumsq, eps * eps))

    # ---- cosine = feat_n @ W_arc_norm^T (prototypes pre-normalized/transposed, f32) ----
    cosine = jnp.dot(feat_n, wnt_ref[...], preferred_element_type=jnp.float32)  # (TB, 196)
    cosine = jnp.clip(cosine, -1.0 + eps, 1.0 - eps)

    # ---- arcface margin ----
    sine = jnp.sqrt(jnp.clip(1.000000001 - cosine * cosine, 0.0, 1.0))
    phi = cosine * cos_m - sine * sin_m
    if easy_margin:
        phi = jnp.where(cosine > 0.0, phi, cosine)
    else:
        phi = jnp.where(cosine > th, phi, cosine - mm)

    # ---- one-hot combine as a single select ----
    col = lax.broadcasted_iota(jnp.int32, cosine.shape, 1)
    out_ref[...] = jnp.where(col == y_ref[...], phi, cosine) * s


def _choose_tile(batch):
    """Pick (TB, B_pad): TB multiple of 8, capped at 512, >= 2 grid steps when batch > 8."""
    b8 = -(-batch // 8) * 8
    if b8 <= 8:
        return b8, b8                         # tiny batch: single step
    tb = min(512, -(-b8 // 16) * 8)           # ~ceil(b8 / 2) rounded up to a multiple of 8
    b_pad = -(-b8 // tb) * tb
    return tb, b_pad


def arcface_forward(x, y, w2, b2, warc, *, s=30.0, m=0.5, easy_margin=False):
    eps = 1e-12
    B, K = x.shape
    dim_mid = w2.shape[0]        # 256
    dim_out = warc.shape[0]      # 196
    K_pad = -(-K // 128) * 128   # 1000 -> 1024 (in-kernel scratch only)

    TB, B_pad = _choose_tile(B)

    # --- activations/labels go in raw (no K pad, no dtype round trip); pad batch rows only
    #     when the tile does not divide the batch ---
    x_p = x.astype(jnp.float32)
    y_p = y.astype(jnp.int32).reshape(B, 1)
    if B_pad != B:
        x_p = jnp.pad(x_p, ((0, B_pad - B), (0, 0)))
        y_p = jnp.pad(y_p, ((0, B_pad - B), (0, 0)))

    # --- one-time parameter plumbing (transpose, K zero-pad, pre-normalize) ---
    w2t = (jnp.zeros((K_pad, dim_mid), jnp.float32)
           .at[:K, :].set(w2.astype(jnp.float32).T).astype(jnp.bfloat16))
    b2_r = b2.reshape(1, dim_mid).astype(jnp.float32)
    # F.normalize(W_arc, dim=1) hoisted out of the kernel (parameter, not per-call data).
    w_norm = jnp.maximum(jnp.sqrt(jnp.sum(warc * warc, axis=1, keepdims=True)), eps)
    wnt = (warc.astype(jnp.float32) / w_norm).T                  # (256, 196), f32

    kernel = functools.partial(
        arcface_kernel,
        s=s,
        cos_m=math.cos(m),
        sin_m=math.sin(m),
        th=math.cos(math.pi - m),
        mm=math.sin(math.pi - m) * m,
        easy_margin=easy_margin,
        eps=eps,
        k_valid=K,
    )

    out = pl.pallas_call(
        kernel,
        out_shape=jax.ShapeDtypeStruct((B_pad, dim_out), jnp.float32),
        grid_spec=pltpu.PrefetchScalarGridSpec(
            num_scalar_prefetch=0,
            grid=(B_pad // TB,),
            in_specs=[
                pl.BlockSpec((TB, K), lambda i: (i, 0)),             # x tile (streams, raw f32)
                pl.BlockSpec((K_pad, dim_mid), lambda i: (0, 0)),    # fc2 weight (resident)
                pl.BlockSpec((1, dim_mid), lambda i: (0, 0)),        # fc2 bias (resident)
                pl.BlockSpec((dim_mid, dim_out), lambda i: (0, 0)),  # arcface protos (resident)
                pl.BlockSpec((TB, 1), lambda i: (i, 0)),             # labels tile
            ],
            out_specs=pl.BlockSpec((TB, dim_out), lambda i: (i, 0)),
            scratch_shapes=[pltpu.VMEM((TB, K_pad), jnp.float32)],
        ),
        compiler_params=pltpu.CompilerParams(
            dimension_semantics=("parallel",),
            vmem_limit_bytes=48 * 1024 * 1024),
    )(x_p, w2t, b2_r, wnt, y_p)

    return out if B_pad == B else out[:B]


def _reference(x, y, w2, b2, warc, *, s=30.0, m=0.5, easy_margin=False):
    eps = 1e-12
    feat = x @ w2.T + b2
    feat_n = feat / jnp.maximum(jnp.linalg.norm(feat, axis=1, keepdims=True), eps)
    w_n = warc / jnp.maximum(jnp.linalg.norm(warc, axis=1, keepdims=True), eps)
    cosine = jnp.clip(feat_n @ w_n.T, -1.0 + eps, 1.0 - eps)
    sine = jnp.sqrt(jnp.clip(1.000000001 - cosine ** 2, 0.0, 1.0))
    phi = cosine * math.cos(m) - sine * math.sin(m)
    if easy_margin:
        phi = jnp.where(cosine > 0.0, phi, cosine)
    else:
        phi = jnp.where(cosine > math.cos(math.pi - m), phi,
                        cosine - math.sin(math.pi - m) * m)
    one_hot = jax.nn.one_hot(y, warc.shape[0], dtype=jnp.float32)
    return (one_hot * phi + (1.0 - one_hot) * cosine) * s


def _xavier_uniform(key, shape):
    fan_out, fan_in = shape
    limit = math.sqrt(6.0 / (fan_in + fan_out))
    return jax.random.uniform(key, shape, jnp.float32, -limit, limit)


if __name__ == "__main__":
    key = jax.random.PRNGKey(0)
    k_x, k_y, k_w2, k_b2, k_arc = jax.random.split(key, 5)

    B, dim_feat, dim_mid, dim_out = 8, 1000, 256, 196

    # Deterministic inputs / parameters (synthetic, no checkpoint).
    x = jax.random.normal(k_x, (B, dim_feat), jnp.float32)          # backbone features
    y = jax.random.randint(k_y, (B,), 0, dim_out, jnp.int32)        # class labels
    w2 = _xavier_uniform(k_w2, (dim_mid, dim_feat))                  # fc2 weight
    b2 = jax.random.uniform(k_b2, (dim_mid,), jnp.float32,
                            -1.0 / math.sqrt(dim_feat), 1.0 / math.sqrt(dim_feat))
    warc = _xavier_uniform(k_arc, (dim_out, dim_mid))                # arcface prototypes

    out = arcface_forward(x, y, w2, b2, warc, s=30.0, m=0.5, easy_margin=False)
    out = jax.block_until_ready(out)

    ref = _reference(x, y, w2, b2, warc, s=30.0, m=0.5, easy_margin=False)
    assert out.shape == (B, dim_out)
    # The fc2 matmul uses bf16 MXU operands (f32 accumulation) -> ~1e-3-level cosine error,
    # i.e. a few e-2 after the s=30 scaling; tolerance is set accordingly.
    assert jnp.allclose(out, ref, atol=7.5e-2, rtol=2e-2), \
        f"max abs diff {float(jnp.max(jnp.abs(out - ref)))}"

    print("KERNEL_OK")
</pallas_src>

<mosaic_0001>
module attributes {stable_mosaic.version = 11 : i64} {
  func.func @arcface_kernel(%arg0: i32, %arg1: memref<8x1000xf32, #tpu.memory_space<vmem>>, %arg2: memref<1024x256xbf16, #tpu.memory_space<vmem>>, %arg3: memref<1x256xf32, #tpu.memory_space<vmem>>, %arg4: memref<256x196xf32, #tpu.memory_space<vmem>>, %arg5: memref<8x1xi32, #tpu.memory_space<vmem>>, %arg6: memref<8x196xf32, #tpu.memory_space<vmem>>, %arg7: memref<8x1024xf32, #tpu.memory_space<vmem>>) attributes {dimension_semantics = [#tpu.dimension_semantics<parallel>], iteration_bounds = array<i64: 1>, scalar_prefetch = 0 : i64, scratch_operands = 1 : i64, tpu.core_type = #tpu.core_type<tc>, window_params = [{transform_indices = @transform_0, window_bounds = array<i64: 8, 1000>}, {pipeline_mode = #tpu.pipeline_mode<synchronous>, transform_indices = @transform_1, window_bounds = array<i64: 1024, 256>}, {pipeline_mode = #tpu.pipeline_mode<synchronous>, transform_indices = @transform_2, window_bounds = array<i64: 1, 256>}, {pipeline_mode = #tpu.pipeline_mode<synchronous>, transform_indices = @transform_3, window_bounds = array<i64: 256, 196>}, {transform_indices = @transform_4, window_bounds = array<i64: 8, 1>}, {transform_indices = @transform_5, window_bounds = array<i64: 8, 196>}]} {
    %c0 = arith.constant 0 : index
    %c0_0 = arith.constant 0 : index
    %0 = vector.load %arg1[%c0, %c0_0] : memref<8x1000xf32, #tpu.memory_space<vmem>>, vector<8x1000xf32>
    %c0_1 = arith.constant 0 : index
    %c0_2 = arith.constant 0 : index
    %1 = vector.load %arg7[%c0_1, %c0_2] : memref<8x1024xf32, #tpu.memory_space<vmem>>, vector<8x1000xf32>
    tpu.vector_store %arg7[%c0_1, %c0_2], %0 {strides = array<i32>} : memref<8x1024xf32, #tpu.memory_space<vmem>>, vector<8x1000xf32>,
    %cst = arith.constant 0.000000e+00 : f32
    %2 = vector.broadcast %cst : f32 to vector<8x24xf32>
    %c0_3 = arith.constant 0 : index
    %c1000 = arith.constant 1000 : index
    %3 = vector.load %arg7[%c0_3, %c1000] : memref<8x1024xf32, #tpu.memory_space<vmem>>, vector<8x24xf32>
    tpu.vector_store %arg7[%c0_3, %c1000], %2 {strides = array<i32>} : memref<8x1024xf32, #tpu.memory_space<vmem>>, vector<8x24xf32>,
    %c0_4 = arith.constant 0 : index
    %c0_5 = arith.constant 0 : index
    %4 = vector.load %arg7[%c0_4, %c0_5] : memref<8x1024xf32, #tpu.memory_space<vmem>>, vector<8x1024xf32>
    %5 = arith.truncf %4 : vector<8x1024xf32> to vector<8x1024xbf16>
    %c0_6 = arith.constant 0 : index
    %c0_7 = arith.constant 0 : index
    %6 = vector.load %arg2[%c0_6, %c0_7] : memref<1024x256xbf16, #tpu.memory_space<vmem>>, vector<1024x256xbf16>
    %cst_8 = arith.constant dense<0.000000e+00> : vector<8x256xf32>
    %7 = tpu.matmul %5, %6, %cst_8 {dimension_numbers = #tpu.dot_dimension_numbers<[1], [0], [0], [1], [0, 0, 1, 1], [], []>} : vector<8x1024xbf16>, vector<1024x256xbf16>, vector<8x256xf32> -> vector<8x256xf32>
    %c0_9 = arith.constant 0 : index
    %c0_10 = arith.constant 0 : index
    %8 = vector.load %arg3[%c0_9, %c0_10] : memref<1x256xf32, #tpu.memory_space<vmem>>, vector<1x256xf32>
    %9 = vector.broadcast %8 : vector<1x256xf32> to vector<8x256xf32>
    %10 = arith.addf %7, %9 : vector<8x256xf32>
    %11 = arith.mulf %10, %10 : vector<8x256xf32>
    %cst_11 = arith.constant dense<0.000000e+00> : vector<8xf32>
    %12 = vector.multi_reduction <add>, %11, %cst_11 [1] : vector<8x256xf32> to vector<8xf32>
    %13 = vector.shape_cast %12 : vector<8xf32> to vector<8x1xf32>
    %cst_12 = arith.constant 1.000000e-24 : f32
    %14 = vector.broadcast %cst_12 : f32 to vector<8x1xf32>
    %15 = arith.maximumf %13, %14 : vector<8x1xf32>
    %16 = math.rsqrt %15 : vector<8x1xf32>
    %17 = vector.broadcast %16 : vector<8x1xf32> to vector<8x256xf32>
    %18 = arith.mulf %10, %17 : vector<8x256xf32>
    %c0_13 = arith.constant 0 : index
    %c0_14 = arith.constant 0 : index
    %19 = vector.load %arg4[%c0_13, %c0_14] : memref<256x196xf32, #tpu.memory_space<vmem>>, vector<256x196xf32>
    %cst_15 = arith.constant dense<0.000000e+00> : vector<8x196xf32>
    %20 = tpu.matmul %18, %19, %cst_15 {dimension_numbers = #tpu.dot_dimension_numbers<[1], [0], [0], [1], [0, 0, 1, 1], [], []>} : vector<8x256xf32>, vector<256x196xf32>, vector<8x196xf32> -> vector<8x196xf32>
    %cst_16 = arith.constant -1.000000e+00 : f32
    %cst_17 = arith.constant 1.000000e+00 : f32
    %21 = vector.broadcast %cst_16 : f32 to vector<8x196xf32>
    %22 = arith.maximumf %21, %20 : vector<8x196xf32>
    %23 = vector.broadcast %cst_17 : f32 to vector<8x196xf32>
    %24 = arith.minimumf %23, %22 : vector<8x196xf32>
    %25 = arith.mulf %24, %24 : vector<8x196xf32>
    %cst_18 = arith.constant 1.000000e+00 : f32
    %26 = vector.broadcast %cst_18 : f32 to vector<8x196xf32>
    %27 = arith.subf %26, %25 : vector<8x196xf32>
    %cst_19 = arith.constant 0.000000e+00 : f32
    %cst_20 = arith.constant 1.000000e+00 : f32
    %28 = vector.broadcast %cst_19 : f32 to vector<8x196xf32>
    %29 = arith.maximumf %28, %27 : vector<8x196xf32>
    %30 = vector.broadcast %cst_20 : f32 to vector<8x196xf32>
    %31 = arith.minimumf %30, %29 : vector<8x196xf32>
    %32 = math.sqrt %31 : vector<8x196xf32>
    %cst_21 = arith.constant 0.87758255 : f32
    %33 = vector.broadcast %cst_21 : f32 to vector<8x196xf32>
    %34 = arith.mulf %24, %33 : vector<8x196xf32>
    %cst_22 = arith.constant 0.47942555 : f32
    %35 = vector.broadcast %cst_22 : f32 to vector<8x196xf32>
    %36 = arith.mulf %32, %35 : vector<8x196xf32>
    %37 = arith.subf %34, %36 : vector<8x196xf32>
    %cst_23 = arith.constant -0.87758255 : f32
    %38 = vector.broadcast %cst_23 : f32 to vector<8x196xf32>
    %39 = arith.cmpf ogt, %24, %38 : vector<8x196xf32>
    %cst_24 = arith.constant 0.239712775 : f32
    %40 = vector.broadcast %cst_24 : f32 to vector<8x196xf32>
    %41 = arith.subf %24, %40 : vector<8x196xf32>
    %42 = arith.select %39, %37, %41 : vector<8x196xi1>, vector<8x196xf32>
    %43 = tpu.iota {dimensions = array<i32: 1>} : vector<8x196xi32>
    %c0_25 = arith.constant 0 : index
    %c0_26 = arith.constant 0 : index
    %44 = vector.load %arg5[%c0_25, %c0_26] : memref<8x1xi32, #tpu.memory_space<vmem>>, vector<8x1xi32>
    %45 = vector.broadcast %44 : vector<8x1xi32> to vector<8x196xi32>
    %46 = arith.cmpi eq, %43, %45 : vector<8x196xi32>
    %47 = arith.select %46, %42, %24 : vector<8x196xi1>, vector<8x196xf32>
    %cst_27 = arith.constant 3.000000e+01 : f32
    %48 = vector.broadcast %cst_27 : f32 to vector<8x196xf32>
    %49 = arith.mulf %47, %48 : vector<8x196xf32>
    %c0_28 = arith.constant 0 : index
    %c0_29 = arith.constant 0 : index
    %50 = vector.load %arg6[%c0_28, %c0_29] : memref<8x196xf32, #tpu.memory_space<vmem>>, vector<8x196xf32>
    tpu.vector_store %arg6[%c0_28, %c0_29], %49 {strides = array<i32>} : memref<8x196xf32, #tpu.memory_space<vmem>>, vector<8x196xf32>,
    return
  }
  func.func @transform_0(%arg0: i32) -> (i32, i32) {
    %c0_i32 = arith.constant 0 : i32
    %c0_i32_0 = arith.constant 0 : i32
    return %arg0, %c0_i32 : i32, i32
  }
  func.func @transform_1(%arg0: i32) -> (i32, i32) {
    %c0_i32 = arith.constant 0 : i32
    %c0_i32_0 = arith.constant 0 : i32
    %c0_i32_1 = arith.constant 0 : i32
    return %c0_i32, %c0_i32_0 : i32, i32
  }
  func.func @transform_2(%arg0: i32) -> (i32, i32) {
    %c0_i32 = arith.constant 0 : i32
    %c0_i32_0 = arith.constant 0 : i32
    %c0_i32_1 = arith.constant 0 : i32
    return %c0_i32, %c0_i32_0 : i32, i32
  }
  func.func @transform_3(%arg0: i32) -> (i32, i32) {
    %c0_i32 = arith.constant 0 : i32
    %c0_i32_0 = arith.constant 0 : i32
    %c0_i32_1 = arith.constant 0 : i32
    return %c0_i32, %c0_i32_0 : i32, i32
  }
  func.func @transform_4(%arg0: i32) -> (i32, i32) {
    %c0_i32 = arith.constant 0 : i32
    %c0_i32_0 = arith.constant 0 : i32
    return %arg0, %c0_i32 : i32, i32
  }
  func.func @transform_5(%arg0: i32) -> (i32, i32) {
    %c0_i32 = arith.constant 0 : i32
    %c0_i32_0 = arith.constant 0 : i32
    return %arg0, %c0_i32 : i32, i32
  }
}

</mosaic_0001>

<llo_original>
// kernel: tpu_custom_call.1
$region0: #{tpu_custom_call.1}
  #allocation0 [shape = 'u32[]', space=smem, size = 0x4, offset = 0x4, fixed_abs, tag = 'smem constant byte address 0x4 - core index']
  #allocation1 [shape = 'u32[144,128]{1,0:T(1,128)}', space=vmem, size = 0x12000, scoped, tag = 'internal scratch']
  #allocation2 [shape = 'f32[8,1024]{1,0:T(8,128)}', space=vmem, size = 0x8000, scoped, tag = 'scratch operand']
  %s0 = inlined_call_operand.vmem [shape: f32[8,1000], index: 0, kind: input, shape index: {}]
  %s1 = inlined_call_operand.hbm [shape: bf16[1024,256], index: 1, kind: input, shape index: {}]
  %s2 = inlined_call_operand.vmem [shape: f32[1,256], index: 2, kind: input, shape index: {}]
  %s3 = inlined_call_operand.vmem [shape: f32[256,196], index: 3, kind: input, shape index: {}]
  %s4 = inlined_call_operand.vmem [shape: s32[8,1], index: 4, kind: input, shape index: {}]
  %s5 = inlined_call_operand.hbm [shape: f32[8,196], index: 5, kind: output, shape index: {}]
  %s6 = sld [smem:[#allocation0]]
  $region34: #{tpu_custom_call.1} parent=0
    _
  %s8 = ssub.s32 1, %s6
  %s9 = scalar_select 0, %s8, %s6
  $region1: #{tpu_custom_call.1} parent=0
    #allocation3 [shape = 'u8[524288]{0}', space=vmem, size = 0x80000, scoped, tag = 'input window, operand 1, single buffered']
    #allocation4 [shape = 's32[1]{0}', space=sflag, size = 0x4, scoped, tag = 'scoped memory for tpu_custom_call.1']
    #allocation5 [shape = 's32[1]{0}', space=sflag, size = 0x4, scoped, tag = 'scoped memory for tpu_custom_call.1']
    #allocation6 [shape = 'u8[8192]{0}', space=vmem, size = 0x2000, scoped, tag = 'output window, operand 0, single buffered']
    %10 = vsyncpa [#allocation4], 0
    %11 = vsyncpa [#allocation5], 0
    // Predicated region
    $region2: #{tpu_custom_call.1} parent=1 // pred_check
      _
    $region3: #{tpu_custom_call.1} parent=1 // pred_check_branch
      %13 = sbr.rel (0) target = $region5
    $region4: #{tpu_custom_call.1} parent=1 // pred_region
      _
    $region5: #{tpu_custom_call.1} parent=1 // pred_fallthru
      _
    // Predicated region
    $region6: #{tpu_custom_call.1} parent=1 // pred_check
      _
    $region7: #{tpu_custom_call.1} parent=1 // pred_check_branch
      %15 = sbr.rel (0) target = $region9
    $region8: #{tpu_custom_call.1} parent=1 // pred_region
      %s17 = ssub.s32 16384, 16384
      %18 = vsyncadd [#allocation4], %s17
      %s19 = sshll.u32 [#allocation3], 4
      %s20 = int_to_ptr.vmem [resolvable:$true] %s19
      %25 = dma.hbm_to_vmem [thread:$0]  %s1, 16384, %s20, [#allocation4], 128, 128, 8
    $region9: #{tpu_custom_call.1} parent=1 // pred_fallthru
      _
    // Predicated region
    $region10: #{tpu_custom_call.1} parent=1 // pred_check
      _
    $region11: #{tpu_custom_call.1} parent=1 // pred_check_branch
      %27 = sbr.rel (0) target = $region13
    $region12: #{tpu_custom_call.1} parent=1 // pred_region
      _
    $region13: #{tpu_custom_call.1} parent=1 // pred_fallthru
      _
    // Predicated region
    $region14: #{tpu_custom_call.1} parent=1 // pred_check
      _
    $region15: #{tpu_custom_call.1} parent=1 // pred_check_branch
      %29 = sbr.rel (0) target = $region17
    $region16: #{tpu_custom_call.1} parent=1 // pred_region
      _
    $region17: #{tpu_custom_call.1} parent=1 // pred_fallthru
      _
    // Predicated region
    $region18: #{tpu_custom_call.1} parent=1 // pred_check
      _
    $region19: #{tpu_custom_call.1} parent=1 // pred_check_branch
      %31 = sbr.rel (0) target = $region21
    $region20: #{tpu_custom_call.1} parent=1 // pred_region
      _
    $region21: #{tpu_custom_call.1} parent=1 // pred_fallthru
      _
    // Predicated region
    $region22: #{tpu_custom_call.1} parent=1 // pred_check
      _
    $region23: #{tpu_custom_call.1} parent=1 // pred_check_branch
      %33 = sbr.rel (0) target = $region25
    $region24: #{tpu_custom_call.1} parent=1 // pred_region
      %34 = dma.done [#allocation4], 16384
    $region25: #{tpu_custom_call.1} parent=1 // pred_fallthru
      _
    %v35 = vld [vmem:[%s0] sm:$0xff]
    %v36 = vld [vmem:[%s0 + $0x8] sm:$0xff]
    %v37 = vld [vmem:[%s0 + $0x10] sm:$0xff]
    %v38 = vld [vmem:[%s0 + $0x18] sm:$0xff]
    %v39 = vld [vmem:[%s0 + $0x20] sm:$0xff]
    %v40 = vld [vmem:[%s0 + $0x28] sm:$0xff]
    %v41 = vld [vmem:[%s0 + $0x30] sm:$0xff]
    %v42 = vld [vmem:[%s0 + $0x38] sm:$0xff]
    %43 = vst [vmem:[#allocation2] sm:$0xff] %v35
    %44 = vst [vmem:[#allocation2 + $0x8] sm:$0xff] %v36
    %45 = vst [vmem:[#allocation2 + $0x10] sm:$0xff] %v37
    %46 = vst [vmem:[#allocation2 + $0x18] sm:$0xff] %v38
    %47 = vst [vmem:[#allocation2 + $0x20] sm:$0xff] %v39
    %48 = vst [vmem:[#allocation2 + $0x28] sm:$0xff] %v40
    %49 = vst [vmem:[#allocation2 + $0x30] sm:$0xff] %v41
    %vm50 = vcmask 850944
    %51 = vst.msk [vmem:[#allocation2 + $0x38] sm:$0xff] %vm50, %v42
    %vm52 = vcmask 1048384
    %53 = vst.msk [vmem:[#allocation2 + $0x38] sm:$0xff] %vm52, 0.0
    %v54 = vld [vmem:[#allocation2] sm:$0xff]
    %v55 = vld [vmem:[#allocation2 + $0x8] sm:$0xff]
    %v56 = vld [vmem:[#allocation2 + $0x10] sm:$0xff]
    %v57 = vld [vmem:[#allocation2 + $0x18] sm:$0xff]
    %v58 = vld [vmem:[#allocation2 + $0x20] sm:$0xff]
    %v59 = vld [vmem:[#allocation2 + $0x28] sm:$0xff]
    %v60 = vld [vmem:[#allocation2 + $0x30] sm:$0xff]
    %v61 = vld [vmem:[#allocation2 + $0x38] sm:$0xff]
    %v62 = vpack.c.bf16 %v54, %v54
    %v63 = vpack.c.bf16 %v55, %v55
    %v64 = vpack.c.bf16 %v56, %v56
    %v65 = vpack.c.bf16 %v57, %v57
    %v66 = vpack.c.bf16 %v58, %v58
    %v67 = vpack.c.bf16 %v59, %v59
    %v68 = vpack.c.bf16 %v60, %v60
    %v69 = vpack.c.bf16 %v61, %v61
    %v70 = vld [vmem:[#allocation3] sm:$0xff]
    %v71 = vld [vmem:[#allocation3 + $0x8] sm:$0xff]
    %v72 = vld [vmem:[#allocation3 + $0x10] sm:$0xff]
    %v73 = vld [vmem:[#allocation3 + $0x18] sm:$0xff]
    %v74 = vld [vmem:[#allocation3 + $0x20] sm:$0xff]
    %v75 = vld [vmem:[#allocation3 + $0x28] sm:$0xff]
    %v76 = vld [vmem:[#allocation3 + $0x30] sm:$0xff]
    %v77 = vld [vmem:[#allocation3 + $0x38] sm:$0xff]
    %v78 = vld [vmem:[#allocation3 + $0x40] sm:$0xff]
    %v79 = vld [vmem:[#allocation3 + $0x48] sm:$0xff]
    %v80 = vld [vmem:[#allocation3 + $0x50] sm:$0xff]
    %v81 = vld [vmem:[#allocation3 + $0x58] sm:$0xff]
    %v82 = vld [vmem:[#allocation3 + $0x60] sm:$0xff]
    %v83 = vld [vmem:[#allocation3 + $0x68] sm:$0xff]
    %v84 = vld [vmem:[#allocation3 + $0x70] sm:$0xff]
    %v85 = vld [vmem:[#allocation3 + $0x78] sm:$0xff]
    %v86 = vld [vmem:[#allocation3 + $0x80] sm:$0xff]
    %v87 = vld [vmem:[#allocation3 + $0x88] sm:$0xff]
    %v88 = vld [vmem:[#allocation3 + $0x90] sm:$0xff]
    %v89 = vld [vmem:[#allocation3 + $0x98] sm:$0xff]
    %v90 = vld [vmem:[#allocation3 + $0xa0] sm:$0xff]
    %v91 = vld [vmem:[#allocation3 + $0xa8] sm:$0xff]
    %v92 = vld [vmem:[#allocation3 + $0xb0] sm:$0xff]
    %v93 = vld [vmem:[#allocation3 + $0xb8] sm:$0xff]
    %v94 = vld [vmem:[#allocation3 + $0xc0] sm:$0xff]
    %v95 = vld [vmem:[#allocation3 + $0xc8] sm:$0xff]
    %v96 = vld [vmem:[#allocation3 + $0xd0] sm:$0xff]
    %v97 = vld [vmem:[#allocation3 + $0xd8] sm:$0xff]
    %v98 = vld [vmem:[#allocation3 + $0xe0] sm:$0xff]
    %v99 = vld [vmem:[#allocation3 + $0xe8] sm:$0xff]
    %v100 = vld [vmem:[#allocation3 + $0xf0] sm:$0xff]
    %v101 = vld [vmem:[#allocation3 + $0xf8] sm:$0xff]
    %v102 = vld [vmem:[#allocation3 + $0x100] sm:$0xff]
    %v103 = vld [vmem:[#allocation3 + $0x108] sm:$0xff]
    %v104 = vld [vmem:[#allocation3 + $0x110] sm:$0xff]
    %v105 = vld [vmem:[#allocation3 + $0x118] sm:$0xff]
    %v106 = vld [vmem:[#allocation3 + $0x120] sm:$0xff]
    %v107 = vld [vmem:[#allocation3 + $0x128] sm:$0xff]
    %v108 = vld [vmem:[#allocation3 + $0x130] sm:$0xff]
    %v109 = vld [vmem:[#allocation3 + $0x138] sm:$0xff]
    %v110 = vld [vmem:[#allocation3 + $0x140] sm:$0xff]
    %v111 = vld [vmem:[#allocation3 + $0x148] sm:$0xff]
    %v112 = vld [vmem:[#allocation3 + $0x150] sm:$0xff]
    %v113 = vld [vmem:[#allocation3 + $0x158] sm:$0xff]
    %v114 = vld [vmem:[#allocation3 + $0x160] sm:$0xff]
    %v115 = vld [vmem:[#allocation3 + $0x168] sm:$0xff]
    %v116 = vld [vmem:[#allocation3 + $0x170] sm:$0xff]
    %v117 = vld [vmem:[#allocation3 + $0x178] sm:$0xff]
    %v118 = vld [vmem:[#allocation3 + $0x180] sm:$0xff]
    %v119 = vld [vmem:[#allocation3 + $0x188] sm:$0xff]
    %v120 = vld [vmem:[#allocation3 + $0x190] sm:$0xff]
    %v121 = vld [vmem:[#allocation3 + $0x198] sm:$0xff]
    %v122 = vld [vmem:[#allocation3 + $0x1a0] sm:$0xff]
    %v123 = vld [vmem:[#allocation3 + $0x1a8] sm:$0xff]
    %v124 = vld [vmem:[#allocation3 + $0x1b0] sm:$0xff]
    %v125 = vld [vmem:[#allocation3 + $0x1b8] sm:$0xff]
    %v126 = vld [vmem:[#allocation3 + $0x1c0] sm:$0xff]
    %v127 = vld [vmem:[#allocation3 + $0x1c8] sm:$0xff]
    %v128 = vld [vmem:[#allocation3 + $0x1d0] sm:$0xff]
    %v129 = vld [vmem:[#allocation3 + $0x1d8] sm:$0xff]
    %v130 = vld [vmem:[#allocation3 + $0x1e0] sm:$0xff]
    %v131 = vld [vmem:[#allocation3 + $0x1e8] sm:$0xff]
    %v132 = vld [vmem:[#allocation3 + $0x1f0] sm:$0xff]
    %v133 = vld [vmem:[#allocation3 + $0x1f8] sm:$0xff]
    %v134 = vld [vmem:[#allocation3 + $0x200] sm:$0xff]
    %v135 = vld [vmem:[#allocation3 + $0x208] sm:$0xff]
    %v136 = vld [vmem:[#allocation3 + $0x210] sm:$0xff]
    %v137 = vld [vmem:[#allocation3 + $0x218] sm:$0xff]
    %v138 = vld [vmem:[#allocation3 + $0x220] sm:$0xff]
    %v139 = vld [vmem:[#allocation3 + $0x228] sm:$0xff]
    %v140 = vld [vmem:[#allocation3 + $0x230] sm:$0xff]
    %v141 = vld [vmem:[#allocation3 + $0x238] sm:$0xff]
    %v142 = vld [vmem:[#allocation3 + $0x240] sm:$0xff]
    %v143 = vld [vmem:[#allocation3 + $0x248] sm:$0xff]
    %v144 = vld [vmem:[#allocation3 + $0x250] sm:$0xff]
    %v145 = vld [vmem:[#allocation3 + $0x258] sm:$0xff]
    %v146 = vld [vmem:[#allocation3 + $0x260] sm:$0xff]
    %v147 = vld [vmem:[#allocation3 + $0x268] sm:$0xff]
    %v148 = vld [vmem:[#allocation3 + $0x270] sm:$0xff]
    %v149 = vld [vmem:[#allocation3 + $0x278] sm:$0xff]
    %v150 = vld [vmem:[#allocation3 + $0x280] sm:$0xff]
    %v151 = vld [vmem:[#allocation3 + $0x288] sm:$0xff]
    %v152 = vld [vmem:[#allocation3 + $0x290] sm:$0xff]
    %v153 = vld [vmem:[#allocation3 + $0x298] sm:$0xff]
    %v154 = vld [vmem:[#allocation3 + $0x2a0] sm:$0xff]
    %v155 = vld [vmem:[#allocation3 + $0x2a8] sm:$0xff]
    %v156 = vld [vmem:[#allocation3 + $0x2b0] sm:$0xff]
    %v157 = vld [vmem:[#allocation3 + $0x2b8] sm:$0xff]
    %v158 = vld [vmem:[#allocation3 + $0x2c0] sm:$0xff]
    %v159 = vld [vmem:[#allocation3 + $0x2c8] sm:$0xff]
    %v160 = vld [vmem:[#allocation3 + $0x2d0] sm:$0xff]
    %v161 = vld [vmem:[#allocation3 + $0x2d8] sm:$0xff]
    %v162 = vld [vmem:[#allocation3 + $0x2e0] sm:$0xff]
    %v163 = vld [vmem:[#allocation3 + $0x2e8] sm:$0xff]
    %v164 = vld [vmem:[#allocation3 + $0x2f0] sm:$0xff]
    %v165 = vld [vmem:[#allocation3 + $0x2f8] sm:$0xff]
    %v166 = vld [vmem:[#allocation3 + $0x300] sm:$0xff]
    %v167 = vld [vmem:[#allocation3 + $0x308] sm:$0xff]
    %v168 = vld [vmem:[#allocation3 + $0x310] sm:$0xff]
    %v169 = vld [vmem:[#allocation3 + $0x318] sm:$0xff]
    %v170 = vld [vmem:[#allocation3 + $0x320] sm:$0xff]
    %v171 = vld [vmem:[#allocation3 + $0x328] sm:$0xff]
    %v172 = vld [vmem:[#allocation3 + $0x330] sm:$0xff]
    %v173 = vld [vmem:[#allocation3 + $0x338] sm:$0xff]
    %v174 = vld [vmem:[#allocation3 + $0x340] sm:$0xff]
    %v175 = vld [vmem:[#allocation3 + $0x348] sm:$0xff]
    %v176 = vld [vmem:[#allocation3 + $0x350] sm:$0xff]
    %v177 = vld [vmem:[#allocation3 + $0x358] sm:$0xff]
    %v178 = vld [vmem:[#allocation3 + $0x360] sm:$0xff]
    %v179 = vld [vmem:[#allocation3 + $0x368] sm:$0xff]
    %v180 = vld [vmem:[#allocation3 + $0x370] sm:$0xff]
    %v181 = vld [vmem:[#allocation3 + $0x378] sm:$0xff]
    %v182 = vld [vmem:[#allocation3 + $0x380] sm:$0xff]
    %v183 = vld [vmem:[#allocation3 + $0x388] sm:$0xff]
    %v184 = vld [vmem:[#allocation3 + $0x390] sm:$0xff]
    %v185 = vld [vmem:[#allocation3 + $0x398] sm:$0xff]
    %v186 = vld [vmem:[#allocation3 + $0x3a0] sm:$0xff]
    %v187 = vld [vmem:[#allocation3 + $0x3a8] sm:$0xff]
    %v188 = vld [vmem:[#allocation3 + $0x3b0] sm:$0xff]
    %v189 = vld [vmem:[#allocation3 + $0x3b8] sm:$0xff]
    %v190 = vld [vmem:[#allocation3 + $0x3c0] sm:$0xff]
    %v191 = vld [vmem:[#allocation3 + $0x3c8] sm:$0xff]
    %v192 = vld [vmem:[#allocation3 + $0x3d0] sm:$0xff]
    %v193 = vld [vmem:[#allocation3 + $0x3d8] sm:$0xff]
    %v194 = vld [vmem:[#allocation3 + $0x3e0] sm:$0xff]
    %v195 = vld [vmem:[#allocation3 + $0x3e8] sm:$0xff]
    %v196 = vld [vmem:[#allocation3 + $0x3f0] sm:$0xff]
    %v197 = vld [vmem:[#allocation3 + $0x3f8] sm:$0xff]
    %v198 = vld [vmem:[%s2] sm:$0x3]
    %v200 = vlaneseq
    %v201 = vshrl.u32 %v200, 7
    %v202 = vsub.s32 0, %v201
    %v203 = vrot.slane %v198, %v202
    %v204 = vlaneseq
    %v205 = vshrl.u32 %v204, 7
    %v206 = vsub.s32 1, %v205
    %v207 = vrot.slane %v198, %v206
    %v338 = vunpack.c.l.b16 %v70
    %v339 = vunpack.c.h.b16 %v70
    %v340 = vunpack.c.l.b16 %v71
    %v341 = vunpack.c.h.b16 %v71
    %v342 = vunpack.c.l.b16 %v72
    %v343 = vunpack.c.h.b16 %v72
    %v344 = vunpack.c.l.b16 %v73
    %v345 = vunpack.c.h.b16 %v73
    %v346 = vunpack.c.l.b16 %v74
    %v347 = vunpack.c.h.b16 %v74
    %v348 = vunpack.c.l.b16 %v75
    %v349 = vunpack.c.h.b16 %v75
    %v350 = vunpack.c.l.b16 %v76
    %v351 = vunpack.c.h.b16 %v76
    %v352 = vunpack.c.l.b16 %v77
    %v353 = vunpack.c.h.b16 %v77
    %v354 = vunpack.c.l.b16 %v78
    %v355 = vunpack.c.h.b16 %v78
    %v356 = vunpack.c.l.b16 %v79
    %v357 = vunpack.c.h.b16 %v79
    %v358 = vunpack.c.l.b16 %v80
    %v359 = vunpack.c.h.b16 %v80
    %v360 = vunpack.c.l.b16 %v81
    %v361 = vunpack.c.h.b16 %v81
    %v362 = vunpack.c.l.b16 %v82
    %v363 = vunpack.c.h.b16 %v82
    %v364 = vunpack.c.l.b16 %v83
    %v365 = vunpack.c.h.b16 %v83
    %v366 = vunpack.c.l.b16 %v84
    %v367 = vunpack.c.h.b16 %v84
    %v368 = vunpack.c.l.b16 %v85
    %v369 = vunpack.c.h.b16 %v85
    %v370 = vunpack.c.l.b16 %v86
    %v371 = vunpack.c.h.b16 %v86
    %v372 = vunpack.c.l.b16 %v87
    %v373 = vunpack.c.h.b16 %v87
    %v374 = vunpack.c.l.b16 %v88
    %v375 = vunpack.c.h.b16 %v88
    %v376 = vunpack.c.l.b16 %v89
    %v377 = vunpack.c.h.b16 %v89
    %v378 = vunpack.c.l.b16 %v90
    %v379 = vunpack.c.h.b16 %v90
    %v380 = vunpack.c.l.b16 %v91
    %v381 = vunpack.c.h.b16 %v91
    %v382 = vunpack.c.l.b16 %v92
    %v383 = vunpack.c.h.b16 %v92
    %v384 = vunpack.c.l.b16 %v93
    %v385 = vunpack.c.h.b16 %v93
    %v386 = vunpack.c.l.b16 %v94
    %v387 = vunpack.c.h.b16 %v94
    %v388 = vunpack.c.l.b16 %v95
    %v389 = vunpack.c.h.b16 %v95
    %v390 = vunpack.c.l.b16 %v96
    %v391 = vunpack.c.h.b16 %v96
    %v392 = vunpack.c.l.b16 %v97
    %v393 = vunpack.c.h.b16 %v97
    %v394 = vunpack.c.l.b16 %v98
    %v395 = vunpack.c.h.b16 %v98
    %v396 = vunpack.c.l.b16 %v99
    %v397 = vunpack.c.h.b16 %v99
    %v398 = vunpack.c.l.b16 %v100
    %v399 = vunpack.c.h.b16 %v100
    %v400 = vunpack.c.l.b16 %v101
    %v401 = vunpack.c.h.b16 %v101
    %v402 = vunpack.c.l.b16 %v102
    %v403 = vunpack.c.h.b16 %v102
    %v404 = vunpack.c.l.b16 %v103
    %v405 = vunpack.c.h.b16 %v103
    %v406 = vunpack.c.l.b16 %v104
    %v407 = vunpack.c.h.b16 %v104
    %v408 = vunpack.c.l.b16 %v105
    %v409 = vunpack.c.h.b16 %v105
    %v410 = vunpack.c.l.b16 %v106
    %v411 = vunpack.c.h.b16 %v106
    %v412 = vunpack.c.l.b16 %v107
    %v413 = vunpack.c.h.b16 %v107
    %v414 = vunpack.c.l.b16 %v108
    %v415 = vunpack.c.h.b16 %v108
    %v416 = vunpack.c.l.b16 %v109
    %v417 = vunpack.c.h.b16 %v109
    %v418 = vunpack.c.l.b16 %v110
    %v419 = vunpack.c.h.b16 %v110
    %v420 = vunpack.c.l.b16 %v111
    %v421 = vunpack.c.h.b16 %v111
    %v422 = vunpack.c.l.b16 %v112
    %v423 = vunpack.c.h.b16 %v112
    %v424 = vunpack.c.l.b16 %v113
    %v425 = vunpack.c.h.b16 %v113
    %v426 = vunpack.c.l.b16 %v114
    %v427 = vunpack.c.h.b16 %v114
    %v428 = vunpack.c.l.b16 %v115
    %v429 = vunpack.c.h.b16 %v115
    %v430 = vunpack.c.l.b16 %v116
    %v431 = vunpack.c.h.b16 %v116
    %v432 = vunpack.c.l.b16 %v117
    %v433 = vunpack.c.h.b16 %v117
    %v434 = vunpack.c.l.b16 %v118
    %v435 = vunpack.c.h.b16 %v118
    %v436 = vunpack.c.l.b16 %v119
    %v437 = vunpack.c.h.b16 %v119
    %v438 = vunpack.c.l.b16 %v120
    %v439 = vunpack.c.h.b16 %v120
    %v440 = vunpack.c.l.b16 %v121
    %v441 = vunpack.c.h.b16 %v121
    %v442 = vunpack.c.l.b16 %v122
    %v443 = vunpack.c.h.b16 %v122
    %v444 = vunpack.c.l.b16 %v123
    %v445 = vunpack.c.h.b16 %v123
    %v446 = vunpack.c.l.b16 %v124
    %v447 = vunpack.c.h.b16 %v124
    %v448 = vunpack.c.l.b16 %v125
    %v449 = vunpack.c.h.b16 %v125
    %v450 = vunpack.c.l.b16 %v126
    %v451 = vunpack.c.h.b16 %v126
    %v452 = vunpack.c.l.b16 %v127
    %v453 = vunpack.c.h.b16 %v127
    %v454 = vunpack.c.l.b16 %v128
    %v455 = vunpack.c.h.b16 %v128
    %v456 = vunpack.c.l.b16 %v129
    %v457 = vunpack.c.h.b16 %v129
    %v458 = vunpack.c.l.b16 %v130
    %v459 = vunpack.c.h.b16 %v130
    %v460 = vunpack.c.l.b16 %v131
    %v461 = vunpack.c.h.b16 %v131
    %v462 = vunpack.c.l.b16 %v132
    %v463 = vunpack.c.h.b16 %v132
    %v464 = vunpack.c.l.b16 %v133
    %v465 = vunpack.c.h.b16 %v133
    %v466 = vunpack.c.l.b16 %v134
    %v467 = vunpack.c.h.b16 %v134
    %v468 = vunpack.c.l.b16 %v135
    %v469 = vunpack.c.h.b16 %v135
    %v470 = vunpack.c.l.b16 %v136
    %v471 = vunpack.c.h.b16 %v136
    %v472 = vunpack.c.l.b16 %v137
    %v473 = vunpack.c.h.b16 %v137
    %v474 = vunpack.c.l.b16 %v138
    %v475 = vunpack.c.h.b16 %v138
    %v476 = vunpack.c.l.b16 %v139
    %v477 = vunpack.c.h.b16 %v139
    %v478 = vunpack.c.l.b16 %v140
    %v479 = vunpack.c.h.b16 %v140
    %v480 = vunpack.c.l.b16 %v141
    %v481 = vunpack.c.h.b16 %v141
    %v482 = vunpack.c.l.b16 %v142
    %v483 = vunpack.c.h.b16 %v142
    %v484 = vunpack.c.l.b16 %v143
    %v485 = vunpack.c.h.b16 %v143
    %v486 = vunpack.c.l.b16 %v144
    %v487 = vunpack.c.h.b16 %v144
    %v488 = vunpack.c.l.b16 %v145
    %v489 = vunpack.c.h.b16 %v145
    %v490 = vunpack.c.l.b16 %v146
    %v491 = vunpack.c.h.b16 %v146
    %v492 = vunpack.c.l.b16 %v147
    %v493 = vunpack.c.h.b16 %v147
    %v494 = vunpack.c.l.b16 %v148
    %v495 = vunpack.c.h.b16 %v148
    %v496 = vunpack.c.l.b16 %v149
    %v497 = vunpack.c.h.b16 %v149
    %v498 = vunpack.c.l.b16 %v150
    %v499 = vunpack.c.h.b16 %v150
    %v500 = vunpack.c.l.b16 %v151
    %v501 = vunpack.c.h.b16 %v151
    %v502 = vunpack.c.l.b16 %v152
    %v503 = vunpack.c.h.b16 %v152
    %v504 = vunpack.c.l.b16 %v153
    %v505 = vunpack.c.h.b16 %v153
    %v506 = vunpack.c.l.b16 %v154
    %v507 = vunpack.c.h.b16 %v154
    %v508 = vunpack.c.l.b16 %v155
    %v509 = vunpack.c.h.b16 %v155
    %v510 = vunpack.c.l.b16 %v156
    %v511 = vunpack.c.h.b16 %v156
    %v512 = vunpack.c.l.b16 %v157
    %v513 = vunpack.c.h.b16 %v157
    %v514 = vunpack.c.l.b16 %v158
    %v515 = vunpack.c.h.b16 %v158
    %v516 = vunpack.c.l.b16 %v159
    %v517 = vunpack.c.h.b16 %v159
    %v518 = vunpack.c.l.b16 %v160
    %v519 = vunpack.c.h.b16 %v160
    %v520 = vunpack.c.l.b16 %v161
    %v521 = vunpack.c.h.b16 %v161
    %v522 = vunpack.c.l.b16 %v162
    %v523 = vunpack.c.h.b16 %v162
    %v524 = vunpack.c.l.b16 %v163
    %v525 = vunpack.c.h.b16 %v163
    %v526 = vunpack.c.l.b16 %v164
    %v527 = vunpack.c.h.b16 %v164
    %v528 = vunpack.c.l.b16 %v165
    %v529 = vunpack.c.h.b16 %v165
    %v530 = vunpack.c.l.b16 %v166
    %v531 = vunpack.c.h.b16 %v166
    %v532 = vunpack.c.l.b16 %v167
    %v533 = vunpack.c.h.b16 %v167
    %v534 = vunpack.c.l.b16 %v168
    %v535 = vunpack.c.h.b16 %v168
    %v536 = vunpack.c.l.b16 %v169
    %v537 = vunpack.c.h.b16 %v169
    %v538 = vunpack.c.l.b16 %v170
    %v539 = vunpack.c.h.b16 %v170
    %v540 = vunpack.c.l.b16 %v171
    %v541 = vunpack.c.h.b16 %v171
    %v542 = vunpack.c.l.b16 %v172
    %v543 = vunpack.c.h.b16 %v172
    %v544 = vunpack.c.l.b16 %v173
    %v545 = vunpack.c.h.b16 %v173
    %v546 = vunpack.c.l.b16 %v174
    %v547 = vunpack.c.h.b16 %v174
    %v548 = vunpack.c.l.b16 %v175
    %v549 = vunpack.c.h.b16 %v175
    %v550 = vunpack.c.l.b16 %v176
    %v551 = vunpack.c.h.b16 %v176
    %v552 = vunpack.c.l.b16 %v177
    %v553 = vunpack.c.h.b16 %v177
    %v554 = vunpack.c.l.b16 %v178
    %v555 = vunpack.c.h.b16 %v178
    %v556 = vunpack.c.l.b16 %v179
    %v557 = vunpack.c.h.b16 %v179
    %v558 = vunpack.c.l.b16 %v180
    %v559 = vunpack.c.h.b16 %v180
    %v560 = vunpack.c.l.b16 %v181
    %v561 = vunpack.c.h.b16 %v181
    %v562 = vunpack.c.l.b16 %v182
    %v563 = vunpack.c.h.b16 %v182
    %v564 = vunpack.c.l.b16 %v183
    %v565 = vunpack.c.h.b16 %v183
    %v566 = vunpack.c.l.b16 %v184
    %v567 = vunpack.c.h.b16 %v184
    %v568 = vunpack.c.l.b16 %v185
    %v569 = vunpack.c.h.b16 %v185
    %v570 = vunpack.c.l.b16 %v186
    %v571 = vunpack.c.h.b16 %v186
    %v572 = vunpack.c.l.b16 %v187
    %v573 = vunpack.c.h.b16 %v187
    %v574 = vunpack.c.l.b16 %v188
    %v575 = vunpack.c.h.b16 %v188
    %v576 = vunpack.c.l.b16 %v189
    %v577 = vunpack.c.h.b16 %v189
    %v578 = vunpack.c.l.b16 %v190
    %v579 = vunpack.c.h.b16 %v190
    %v580 = vunpack.c.l.b16 %v191
    %v581 = vunpack.c.h.b16 %v191
    %v582 = vunpack.c.l.b16 %v192
    %v583 = vunpack.c.h.b16 %v192
    %v584 = vunpack.c.l.b16 %v193
    %v585 = vunpack.c.h.b16 %v193
    %v586 = vunpack.c.l.b16 %v194
    %v587 = vunpack.c.h.b16 %v194
    %v588 = vunpack.c.l.b16 %v195
    %v589 = vunpack.c.h.b16 %v195
    %v590 = vunpack.c.l.b16 %v196
    %v591 = vunpack.c.h.b16 %v196
    %v592 = vunpack.c.l.b16 %v197
    %v593 = vunpack.c.h.b16 %v197
    %v594 = vpack.c.b16 %v340, %v338
    %v595 = vpack.c.b16 %v341, %v339
    %v596 = vpack.c.b16 %v344, %v342
    %v597 = vpack.c.b16 %v345, %v343
    %v598 = vpack.c.b16 %v348, %v346
    %v599 = vpack.c.b16 %v349, %v347
    %v600 = vpack.c.b16 %v352, %v350
    %v601 = vpack.c.b16 %v353, %v351
    %v602 = vpack.c.b16 %v356, %v354
    %v603 = vpack.c.b16 %v357, %v355
    %v604 = vpack.c.b16 %v360, %v358
    %v605 = vpack.c.b16 %v361, %v359
    %v606 = vpack.c.b16 %v364, %v362
    %v607 = vpack.c.b16 %v365, %v363
    %v608 = vpack.c.b16 %v368, %v366
    %v609 = vpack.c.b16 %v369, %v367
    %v610 = vpack.c.b16 %v372, %v370
    %v611 = vpack.c.b16 %v373, %v371
    %v612 = vpack.c.b16 %v376, %v374
    %v613 = vpack.c.b16 %v377, %v375
    %v614 = vpack.c.b16 %v380, %v378
    %v615 = vpack.c.b16 %v381, %v379
    %v616 = vpack.c.b16 %v384, %v382
    %v617 = vpack.c.b16 %v385, %v383
    %v618 = vpack.c.b16 %v388, %v386
    %v619 = vpack.c.b16 %v389, %v387
    %v620 = vpack.c.b16 %v392, %v390
    %v621 = vpack.c.b16 %v393, %v391
    %v622 = vpack.c.b16 %v396, %v394
    %v623 = vpack.c.b16 %v397, %v395
    %v624 = vpack.c.b16 %v400, %v398
    %v625 = vpack.c.b16 %v401, %v399
    %v626 = vpack.c.b16 %v404, %v402
    %v627 = vpack.c.b16 %v405, %v403
    %v628 = vpack.c.b16 %v408, %v406
    %v629 = vpack.c.b16 %v409, %v407
    %v630 = vpack.c.b16 %v412, %v410
    %v631 = vpack.c.b16 %v413, %v411
    %v632 = vpack.c.b16 %v416, %v414
    %v633 = vpack.c.b16 %v417, %v415
    %v634 = vpack.c.b16 %v420, %v418
    %v635 = vpack.c.b16 %v421, %v419
    %v636 = vpack.c.b16 %v424, %v422
    %v637 = vpack.c.b16 %v425, %v423
    %v638 = vpack.c.b16 %v428, %v426
    %v639 = vpack.c.b16 %v429, %v427
    %v640 = vpack.c.b16 %v432, %v430
    %v641 = vpack.c.b16 %v433, %v431
    %v642 = vpack.c.b16 %v436, %v434
    %v643 = vpack.c.b16 %v437, %v435
    %v644 = vpack.c.b16 %v440, %v438
    %v645 = vpack.c.b16 %v441, %v439
    %v646 = vpack.c.b16 %v444, %v442
    %v647 = vpack.c.b16 %v445, %v443
    %v648 = vpack.c.b16 %v448, %v446
    %v649 = vpack.c.b16 %v449, %v447
    %v650 = vpack.c.b16 %v452, %v450
    %v651 = vpack.c.b16 %v453, %v451
    %v652 = vpack.c.b16 %v456, %v454
    %v653 = vpack.c.b16 %v457, %v455
    %v654 = vpack.c.b16 %v460, %v458
    %v655 = vpack.c.b16 %v461, %v459
    %v656 = vpack.c.b16 %v464, %v462
    %v657 = vpack.c.b16 %v465, %v463
    %v658 = vpack.c.b16 %v468, %v466
    %v659 = vpack.c.b16 %v469, %v467
    %v660 = vpack.c.b16 %v472, %v470
    %v661 = vpack.c.b16 %v473, %v471
    %v662 = vpack.c.b16 %v476, %v474
    %v663 = vpack.c.b16 %v477, %v475
    %v664 = vpack.c.b16 %v480, %v478
    %v665 = vpack.c.b16 %v481, %v479
    %v666 = vpack.c.b16 %v484, %v482
    %v667 = vpack.c.b16 %v485, %v483
    %v668 = vpack.c.b16 %v488, %v486
    %v669 = vpack.c.b16 %v489, %v487
    %v670 = vpack.c.b16 %v492, %v490
    %v671 = vpack.c.b16 %v493, %v491
    %v672 = vpack.c.b16 %v496, %v494
    %v673 = vpack.c.b16 %v497, %v495
    %v674 = vpack.c.b16 %v500, %v498
    %v675 = vpack.c.b16 %v501, %v499
    %v676 = vpack.c.b16 %v504, %v502
    %v677 = vpack.c.b16 %v505, %v503
    %v678 = vpack.c.b16 %v508, %v506
    %v679 = vpack.c.b16 %v509, %v507
    %v680 = vpack.c.b16 %v512, %v510
    %v681 = vpack.c.b16 %v513, %v511
    %v682 = vpack.c.b16 %v516, %v514
    %v683 = vpack.c.b16 %v517, %v515
    %v684 = vpack.c.b16 %v520, %v518
    %v685 = vpack.c.b16 %v521, %v519
    %v686 = vpack.c.b16 %v524, %v522
    %v687 = vpack.c.b16 %v525, %v523
    %v688 = vpack.c.b16 %v528, %v526
    %v689 = vpack.c.b16 %v529, %v527
    %v690 = vpack.c.b16 %v532, %v530
    %v691 = vpack.c.b16 %v533, %v531
    %v692 = vpack.c.b16 %v536, %v534
    %v693 = vpack.c.b16 %v537, %v535
    %v694 = vpack.c.b16 %v540, %v538
    %v695 = vpack.c.b16 %v541, %v539
    %v696 = vpack.c.b16 %v544, %v542
    %v697 = vpack.c.b16 %v545, %v543
    %v698 = vpack.c.b16 %v548, %v546
    %v699 = vpack.c.b16 %v549, %v547
    %v700 = vpack.c.b16 %v552, %v550
    %v701 = vpack.c.b16 %v553, %v551
    %v702 = vpack.c.b16 %v556, %v554
    %v703 = vpack.c.b16 %v557, %v555
    %v704 = vpack.c.b16 %v560, %v558
    %v705 = vpack.c.b16 %v561, %v559
    %v706 = vpack.c.b16 %v564, %v562
    %v707 = vpack.c.b16 %v565, %v563
    %v708 = vpack.c.b16 %v568, %v566
    %v709 = vpack.c.b16 %v569, %v567
    %v710 = vpack.c.b16 %v572, %v570
    %v711 = vpack.c.b16 %v573, %v571
    %v712 = vpack.c.b16 %v576, %v574
    %v713 = vpack.c.b16 %v577, %v575
    %v714 = vpack.c.b16 %v580, %v578
    %v715 = vpack.c.b16 %v581, %v579
    %v716 = vpack.c.b16 %v584, %v582
    %v717 = vpack.c.b16 %v585, %v583
    %v718 = vpack.c.b16 %v588, %v586
    %v719 = vpack.c.b16 %v589, %v587
    %v720 = vpack.c.b16 %v592, %v590
    %v721 = vpack.c.b16 %v593, %v591
    %850 = vmatprep.subr.bf16.mxu0 %v595
    %851 = vmatpush1.bf16.msra.mxu0 %v594
    %852 = vmatprep.subr.bf16.mxu0 %v597
    %853 = vmatpush1.bf16.msra.mxu0 %v596
    %854 = vmatprep.subr.bf16.mxu0 %v599
    %855 = vmatpush1.bf16.msra.mxu0 %v598
    %856 = vmatprep.subr.bf16.mxu0 %v601
    %857 = vmatpush1.bf16.msra.mxu0 %v600
    %858 = vmatprep.subr.bf16.mxu0 %v603
    %859 = vmatpush1.bf16.msra.mxu0 %v602
    %860 = vmatprep.subr.bf16.mxu0 %v605
    %861 = vmatpush1.bf16.msra.mxu0 %v604
    %862 = vmatprep.subr.bf16.mxu0 %v607
    %863 = vmatpush1.bf16.msra.mxu0 %v606
    %864 = vmatprep.subr.bf16.mxu0 %v609
    %865 = vmatpush1.bf16.msra.mxu0 %v608
    %866 = vmatprep.subr.bf16.mxu0 %v611
    %867 = vmatpush1.bf16.msra.mxu0 %v610
    %868 = vmatprep.subr.bf16.mxu0 %v613
    %869 = vmatpush1.bf16.msra.mxu0 %v612
    %870 = vmatprep.subr.bf16.mxu0 %v615
    %871 = vmatpush1.bf16.msra.mxu0 %v614
    %872 = vmatprep.subr.bf16.mxu0 %v617
    %873 = vmatpush1.bf16.msra.mxu0 %v616
    %874 = vmatprep.subr.bf16.mxu0 %v619
    %875 = vmatpush1.bf16.msra.mxu0 %v618
    %876 = vmatprep.subr.bf16.mxu0 %v621
    %877 = vmatpush1.bf16.msra.mxu0 %v620
    %878 = vmatprep.subr.bf16.mxu0 %v623
    %879 = vmatpush1.bf16.msra.mxu0 %v622
    %880 = vmatprep.subr.bf16.mxu0 %v625
    %881 = vmatpush1.bf16.msra.mxu0 %v624
    %882 = vmatprep.mubr.bf16.mxu0 %v63
    %883 = vmatmul.mubr.bf16.gmra.mrb[0].mxu0 %v62
    %v884 = vpop.f32.mrb[0].mxu0
    %v885 = vadd.f32 %v203, %v884
    %v886 = vpop.f32.mrb[0].mxu0
    %v887 = vadd.f32 %v207, %v886
    %v888 = vpop.f32.mrb[0].mxu0
    %v889 = vpop.f32.mrb[0].mxu0
    %890 = vdwg.mxu0
    %891 = vmatprep.subr.bf16.mxu0 %v627
    %892 = vmatpush1.bf16.msra.mxu0 %v626
    %893 = vmatprep.subr.bf16.mxu0 %v629
    %894 = vmatpush1.bf16.msra.mxu0 %v628
    %895 = vmatprep.subr.bf16.mxu0 %v631
    %896 = vmatpush1.bf16.msra.mxu0 %v630
    %897 = vmatprep.subr.bf16.mxu0 %v633
    %898 = vmatpush1.bf16.msra.mxu0 %v632
    %899 = vmatprep.subr.bf16.mxu0 %v635
    %900 = vmatpush1.bf16.msra.mxu0 %v634
    %901 = vmatprep.subr.bf16.mxu0 %v637
    %902 = vmatpush1.bf16.msra.mxu0 %v636
    %903 = vmatprep.subr.bf16.mxu0 %v639
    %904 = vmatpush1.bf16.msra.mxu0 %v638
    %905 = vmatprep.subr.bf16.mxu0 %v641
    %906 = vmatpush1.bf16.msra.mxu0 %v640
    %907 = vmatprep.subr.bf16.mxu0 %v643
    %908 = vmatpush1.bf16.msra.mxu0 %v642
    %909 = vmatprep.subr.bf16.mxu0 %v645
    %910 = vmatpush1.bf16.msra.mxu0 %v644
    %911 = vmatprep.subr.bf16.mxu0 %v647
    %912 = vmatpush1.bf16.msra.mxu0 %v646
    %913 = vmatprep.subr.bf16.mxu0 %v649
    %914 = vmatpush1.bf16.msra.mxu0 %v648
    %915 = vmatprep.subr.bf16.mxu0 %v651
    %916 = vmatpush1.bf16.msra.mxu0 %v650
    %917 = vmatprep.subr.bf16.mxu0 %v653
    %918 = vmatpush1.bf16.msra.mxu0 %v652
    %919 = vmatprep.subr.bf16.mxu0 %v655
    %920 = vmatpush1.bf16.msra.mxu0 %v654
    %921 = vmatprep.subr.bf16.mxu0 %v657
    %922 = vmatpush1.bf16.msra.mxu0 %v656
    %923 = vmatprep.mubr.bf16.mxu0 %v65
    %924 = vmatmul.mubr.bf16.gmra.mrb[0].mxu0 %v64
    %v925 = vpop.f32.mrb[0].mxu0
    %v926 = vadd.f32 %v885, %v925
    %v927 = vpop.f32.mrb[0].mxu0
    %v928 = vadd.f32 %v887, %v927
    %v929 = vpop.f32.mrb[0].mxu0
    %v930 = vpop.f32.mrb[0].mxu0
    %931 = vdwg.mxu0
    %932 = vmatprep.subr.bf16.mxu0 %v659
    %933 = vmatpush1.bf16.msra.mxu0 %v658
    %934 = vmatprep.subr.bf16.mxu0 %v661
    %935 = vmatpush1.bf16.msra.mxu0 %v660
    %936 = vmatprep.subr.bf16.mxu0 %v663
    %937 = vmatpush1.bf16.msra.mxu0 %v662
    %938 = vmatprep.subr.bf16.mxu0 %v665
    %939 = vmatpush1.bf16.msra.mxu0 %v664
    %940 = vmatprep.subr.bf16.mxu0 %v667
    %941 = vmatpush1.bf16.msra.mxu0 %v666
    %942 = vmatprep.subr.bf16.mxu0 %v669
    %943 = vmatpush1.bf16.msra.mxu0 %v668
    %944 = vmatprep.subr.bf16.mxu0 %v671
    %945 = vmatpush1.bf16.msra.mxu0 %v670
    %946 = vmatprep.subr.bf16.mxu0 %v673
    %947 = vmatpush1.bf16.msra.mxu0 %v672
    %948 = vmatprep.subr.bf16.mxu0 %v675
    %949 = vmatpush1.bf16.msra.mxu0 %v674
    %950 = vmatprep.subr.bf16.mxu0 %v677
    %951 = vmatpush1.bf16.msra.mxu0 %v676
    %952 = vmatprep.subr.bf16.mxu0 %v679
    %953 = vmatpush1.bf16.msra.mxu0 %v678
    %954 = vmatprep.subr.bf16.mxu0 %v681
    %955 = vmatpush1.bf16.msra.mxu0 %v680
    %956 = vmatprep.subr.bf16.mxu0 %v683
    %957 = vmatpush1.bf16.msra.mxu0 %v682
    %958 = vmatprep.subr.bf16.mxu0 %v685
    %959 = vmatpush1.bf16.msra.mxu0 %v684
    %960 = vmatprep.subr.bf16.mxu0 %v687
    %961 = vmatpush1.bf16.msra.mxu0 %v686
    %962 = vmatprep.subr.bf16.mxu0 %v689
    %963 = vmatpush1.bf16.msra.mxu0 %v688
    %964 = vmatprep.mubr.bf16.mxu0 %v67
    %965 = vmatmul.mubr.bf16.gmra.mrb[0].mxu0 %v66
    %v966 = vpop.f32.mrb[0].mxu0
    %v967 = vadd.f32 %v926, %v966
    %v968 = vpop.f32.mrb[0].mxu0
    %v969 = vadd.f32 %v928, %v968
    %v970 = vpop.f32.mrb[0].mxu0
    %v971 = vpop.f32.mrb[0].mxu0
    %972 = vdwg.mxu0
    %973 = vmatprep.subr.bf16.mxu0 %v691
    %974 = vmatpush1.bf16.msra.mxu0 %v690
    %975 = vmatprep.subr.bf16.mxu0 %v693
    %976 = vmatpush1.bf16.msra.mxu0 %v692
    %977 = vmatprep.subr.bf16.mxu0 %v695
    %978 = vmatpush1.bf16.msra.mxu0 %v694
    %979 = vmatprep.subr.bf16.mxu0 %v697
    %980 = vmatpush1.bf16.msra.mxu0 %v696
    %981 = vmatprep.subr.bf16.mxu0 %v699
    %982 = vmatpush1.bf16.msra.mxu0 %v698
    %983 = vmatprep.subr.bf16.mxu0 %v701
    %984 = vmatpush1.bf16.msra.mxu0 %v700
    %985 = vmatprep.subr.bf16.mxu0 %v703
    %986 = vmatpush1.bf16.msra.mxu0 %v702
    %987 = vmatprep.subr.bf16.mxu0 %v705
    %988 = vmatpush1.bf16.msra.mxu0 %v704
    %989 = vmatprep.subr.bf16.mxu0 %v707
    %990 = vmatpush1.bf16.msra.mxu0 %v706
    %991 = vmatprep.subr.bf16.mxu0 %v709
    %992 = vmatpush1.bf16.msra.mxu0 %v708
    %993 = vmatprep.subr.bf16.mxu0 %v711
    %994 = vmatpush1.bf16.msra.mxu0 %v710
    %995 = vmatprep.subr.bf16.mxu0 %v713
    %996 = vmatpush1.bf16.msra.mxu0 %v712
    %997 = vmatprep.subr.bf16.mxu0 %v715
    %998 = vmatpush1.bf16.msra.mxu0 %v714
    %999 = vmatprep.subr.bf16.mxu0 %v717
    %1000 = vmatpush1.bf16.msra.mxu0 %v716
    %1001 = vmatprep.subr.bf16.mxu0 %v719
    %1002 = vmatpush1.bf16.msra.mxu0 %v718
    %1003 = vmatprep.subr.bf16.mxu0 %v721
    %1004 = vmatpush1.bf16.msra.mxu0 %v720
    %1005 = vmatprep.mubr.bf16.mxu0 %v69
    %1006 = vmatmul.mubr.bf16.gmra.mrb[0].mxu0 %v68
    %v1007 = vpop.f32.mrb[0].mxu0
    %v1008 = vadd.f32 %v967, %v1007
    %v1009 = vpop.f32.mrb[0].mxu0
    %v1010 = vadd.f32 %v969, %v1009
    %v1011 = vpop.f32.mrb[0].mxu0
    %v1012 = vpop.f32.mrb[0].mxu0
    %1013 = vdwg.mxu0
    %v1014 = vmul.f32 %v1008, %v1008
    %v1015 = vmul.f32 %v1010, %v1010
    %v1016 = vadd.f32 %v1014, %v1015
    %1017 = vadd.xlane.f32.xlu0 %v1016
    %v1018 = vpop.xlane.xlu0 %1017
    %v1019 = vmax.f32 %v1018, 1e-24
    %v1020 = vrsqrt.pop %v1019
    %v1021 = vmul.f32 %v1008, %v1020
    %v1022 = vmul.f32 %v1010, %v1020
    %v1023 = vld [vmem:[%s3] sm:$0xff]
    %v1024 = vld [vmem:[%s3 + $0x8] sm:$0xff]
    %v1025 = vld [vmem:[%s3 + $0x10] sm:$0xff]
    %v1026 = vld [vmem:[%s3 + $0x18] sm:$0xff]
    %v1027 = vld [vmem:[%s3 + $0x20] sm:$0xff]
    %v1028 = vld [vmem:[%s3 + $0x28] sm:$0xff]
    %v1029 = vld [vmem:[%s3 + $0x30] sm:$0xff]
    %v1030 = vld [vmem:[%s3 + $0x38] sm:$0xff]
    %v1031 = vld [vmem:[%s3 + $0x40] sm:$0xff]
    %v1032 = vld [vmem:[%s3 + $0x48] sm:$0xff]
    %v1033 = vld [vmem:[%s3 + $0x50] sm:$0xff]
    %v1034 = vld [vmem:[%s3 + $0x58] sm:$0xff]
    %v1035 = vld [vmem:[%s3 + $0x60] sm:$0xff]
    %v1036 = vld [vmem:[%s3 + $0x68] sm:$0xff]
    %v1037 = vld [vmem:[%s3 + $0x70] sm:$0xff]
    %v1038 = vld [vmem:[%s3 + $0x78] sm:$0xff]
    %v1039 = vld [vmem:[%s3 + $0x80] sm:$0xff]
    %v1040 = vld [vmem:[%s3 + $0x88] sm:$0xff]
    %v1041 = vld [vmem:[%s3 + $0x90] sm:$0xff]
    %v1042 = vld [vmem:[%s3 + $0x98] sm:$0xff]
    %v1043 = vld [vmem:[%s3 + $0xa0] sm:$0xff]
    %v1044 = vld [vmem:[%s3 + $0xa8] sm:$0xff]
    %v1045 = vld [vmem:[%s3 + $0xb0] sm:$0xff]
    %v1046 = vld [vmem:[%s3 + $0xb8] sm:$0xff]
    %v1047 = vld [vmem:[%s3 + $0xc0] sm:$0xff]
    %v1048 = vld [vmem:[%s3 + $0xc8] sm:$0xff]
    %v1049 = vld [vmem:[%s3 + $0xd0] sm:$0xff]
    %v1050 = vld [vmem:[%s3 + $0xd8] sm:$0xff]
    %v1051 = vld [vmem:[%s3 + $0xe0] sm:$0xff]
    %v1052 = vld [vmem:[%s3 + $0xe8] sm:$0xff]
    %v1053 = vld [vmem:[%s3 + $0xf0] sm:$0xff]
    %v1054 = vld [vmem:[%s3 + $0xf8] sm:$0xff]
    %v1055 = vld [vmem:[%s3 + $0x100] sm:$0xff]
    %v1056 = vld [vmem:[%s3 + $0x108] sm:$0xff]
    %v1057 = vld [vmem:[%s3 + $0x110] sm:$0xff]
    %v1058 = vld [vmem:[%s3 + $0x118] sm:$0xff]
    %v1059 = vld [vmem:[%s3 + $0x120] sm:$0xff]
    %v1060 = vld [vmem:[%s3 + $0x128] sm:$0xff]
    %v1061 = vld [vmem:[%s3 + $0x130] sm:$0xff]
    %v1062 = vld [vmem:[%s3 + $0x138] sm:$0xff]
    %v1063 = vld [vmem:[%s3 + $0x140] sm:$0xff]
    %v1064 = vld [vmem:[%s3 + $0x148] sm:$0xff]
    %v1065 = vld [vmem:[%s3 + $0x150] sm:$0xff]
    %v1066 = vld [vmem:[%s3 + $0x158] sm:$0xff]
    %v1067 = vld [vmem:[%s3 + $0x160] sm:$0xff]
    %v1068 = vld [vmem:[%s3 + $0x168] sm:$0xff]
    %v1069 = vld [vmem:[%s3 + $0x170] sm:$0xff]
    %v1070 = vld [vmem:[%s3 + $0x178] sm:$0xff]
    %v1071 = vld [vmem:[%s3 + $0x180] sm:$0xff]
    %v1072 = vld [vmem:[%s3 + $0x188] sm:$0xff]
    %v1073 = vld [vmem:[%s3 + $0x190] sm:$0xff]
    %v1074 = vld [vmem:[%s3 + $0x198] sm:$0xff]
    %v1075 = vld [vmem:[%s3 + $0x1a0] sm:$0xff]
    %v1076 = vld [vmem:[%s3 + $0x1a8] sm:$0xff]
    %v1077 = vld [vmem:[%s3 + $0x1b0] sm:$0xff]
    %v1078 = vld [vmem:[%s3 + $0x1b8] sm:$0xff]
    %v1079 = vld [vmem:[%s3 + $0x1c0] sm:$0xff]
    %v1080 = vld [vmem:[%s3 + $0x1c8] sm:$0xff]
    %v1081 = vld [vmem:[%s3 + $0x1d0] sm:$0xff]
    %v1082 = vld [vmem:[%s3 + $0x1d8] sm:$0xff]
    %v1083 = vld [vmem:[%s3 + $0x1e0] sm:$0xff]
    %v1084 = vld [vmem:[%s3 + $0x1e8] sm:$0xff]
    %v1085 = vld [vmem:[%s3 + $0x1f0] sm:$0xff]
    %v1086 = vld [vmem:[%s3 + $0x1f8] sm:$0xff]
    %1087 = vmatprep.subr.mxu0 %v1024
    %1088 = vmatpush1.msra.mxu0 %v1023
    %1089 = vmatprep.subr.mxu0 %v1026
    %1090 = vmatpush1.msra.mxu0 %v1025
    %1091 = vmatprep.subr.mxu0 %v1028
    %1092 = vmatpush1.msra.mxu0 %v1027
    %1093 = vmatprep.subr.mxu0 %v1030
    %1094 = vmatpush1.msra.mxu0 %v1029
    %1095 = vmatprep.subr.mxu0 %v1032
    %1096 = vmatpush1.msra.mxu0 %v1031
    %1097 = vmatprep.subr.mxu0 %v1034
    %1098 = vmatpush1.msra.mxu0 %v1033
    %1099 = vmatprep.subr.mxu0 %v1036
    %1100 = vmatpush1.msra.mxu0 %v1035
    %1101 = vmatprep.subr.mxu0 %v1038
    %1102 = vmatpush1.msra.mxu0 %v1037
    %1103 = vmatprep.subr.mxu0 %v1040
    %1104 = vmatpush1.msra.mxu0 %v1039
    %1105 = vmatprep.subr.mxu0 %v1042
    %1106 = vmatpush1.msra.mxu0 %v1041
    %1107 = vmatprep.subr.mxu0 %v1044
    %1108 = vmatpush1.msra.mxu0 %v1043
    %1109 = vmatprep.subr.mxu0 %v1046
    %1110 = vmatpush1.msra.mxu0 %v1045
    %1111 = vmatprep.subr.mxu0 %v1048
    %1112 = vmatpush1.msra.mxu0 %v1047
    %1113 = vmatprep.subr.mxu0 %v1050
    %1114 = vmatpush1.msra.mxu0 %v1049
    %1115 = vmatprep.subr.mxu0 %v1052
    %1116 = vmatpush1.msra.mxu0 %v1051
    %1117 = vmatprep.subr.mxu0 %v1054
    %1118 = vmatpush1.msra.mxu0 %v1053
    %1119 = vmatprep.subr.mxu0 %v1056
    %1120 = vmatpush1.msra.mxu0 %v1055
    %1121 = vmatprep.subr.mxu0 %v1058
    %1122 = vmatpush1.msra.mxu0 %v1057
    %1123 = vmatprep.subr.mxu0 %v1060
    %1124 = vmatpush1.msra.mxu0 %v1059
    %1125 = vmatprep.subr.mxu0 %v1062
    %1126 = vmatpush1.msra.mxu0 %v1061
    %1127 = vmatprep.subr.mxu0 %v1064
    %1128 = vmatpush1.msra.mxu0 %v1063
    %1129 = vmatprep.subr.mxu0 %v1066
    %1130 = vmatpush1.msra.mxu0 %v1065
    %1131 = vmatprep.subr.mxu0 %v1068
    %1132 = vmatpush1.msra.mxu0 %v1067
    %1133 = vmatprep.subr.mxu0 %v1070
    %1134 = vmatpush1.msra.mxu0 %v1069
    %1135 = vmatprep.subr.mxu0 %v1072
    %1136 = vmatpush1.msra.mxu0 %v1071
    %1137 = vmatprep.subr.mxu0 %v1074
    %1138 = vmatpush1.msra.mxu0 %v1073
    %1139 = vmatprep.subr.mxu0 %v1076
    %1140 = vmatpush1.msra.mxu0 %v1075
    %1141 = vmatprep.subr.mxu0 %v1078
    %1142 = vmatpush1.msra.mxu0 %v1077
    %1143 = vmatprep.subr.mxu0 %v1080
    %1144 = vmatpush1.msra.mxu0 %v1079
    %1145 = vmatprep.subr.mxu0 %v1082
    %1146 = vmatpush1.msra.mxu0 %v1081
    %1147 = vmatprep.subr.mxu0 %v1084
    %1148 = vmatpush1.msra.mxu0 %v1083
    %1149 = vmatprep.subr.mxu0 %v1086
    %1150 = vmatpush1.msra.mxu0 %v1085
    %1151 = vmatprep.mubr.f32.mxu0 %v1022
    %1152 = vmatmul.mubr.f32.gmra.mrb[0].mxu0 %v1021
    %v1153 = vpop.f32.mrb[0].mxu0
    %v1154 = vadd.f32 0.0, %v1153
    %v1155 = vpop.f32.mrb[0].mxu0
    %v1156 = vadd.f32 0.0, %v1155
    %1157 = vdwg.mxu0
    %v1158 = vmax.f32 %v1154, -1.0
    %v1159 = vmax.f32 %v1156, -1.0
    %v1160 = vmin.f32 %v1158, 1.0
    %v1161 = vmin.f32 %v1159, 1.0
    %v1162 = vmul.f32 %v1160, %v1160
    %v1163 = vmul.f32 %v1161, %v1161
    %v1164 = vsub.f32 1.0, %v1162
    %v1165 = vsub.f32 1.0, %v1163
    %v1166 = vmax.f32 %v1164, 0.0
    %v1167 = vmax.f32 %v1165, 0.0
    %v1168 = vmin.f32 %v1166, 1.0
    %v1169 = vmin.f32 %v1167, 1.0
    %v1170 = vrsqrt.pop %v1168
    %v1171 = vmul.f32 %v1168, %v1170
    %vm1172 = vcmp.eq.f32.partialorder %v1168, inf
    %v1173 = vsel %vm1172, %v1168, %v1171
    %vm1174 = vcmp.eq.f32.partialorder %v1168, 0.0
    %v1175 = vand.u32 %v1168, 2147483648
    %v1176 = vsel %vm1174, %v1175, %v1173
    %v1177 = vrsqrt.pop %v1169
    %v1178 = vmul.f32 %v1169, %v1177
    %vm1179 = vcmp.eq.f32.partialorder %v1169, inf
    %v1180 = vsel %vm1179, %v1169, %v1178
    %vm1181 = vcmp.eq.f32.partialorder %v1169, 0.0
    %v1182 = vand.u32 %v1169, 2147483648
    %v1183 = vsel %vm1181, %v1182, %v1180
    %v1184 = vmul.f32 %v1160, 0.87758255
    %v1185 = vmul.f32 %v1161, 0.87758255
    %v1186 = vmul.f32 %v1176, 0.47942555
    %v1187 = vmul.f32 %v1183, 0.47942555
    %v1188 = vsub.f32 %v1184, %v1186
    %v1189 = vsub.f32 %v1185, %v1187
    %vm1190 = vcmp.gt.f32.partialorder %v1160, -0.87758255
    %vm1191 = vcmp.gt.f32.partialorder %v1161, -0.87758255
    %v1192 = vsub.f32 %v1160, 0.23971277
    %v1193 = vsub.f32 %v1161, 0.23971277
    %v1194 = vsel %vm1190, %v1188, %v1192
    %v1195 = vsel %vm1191, %v1189, %v1193
    %v1196 = vlaneseq
    %v1197 = vand.u32 %v1196, 127
    %v1198 = vadd.s32 %v1197, 128
    %v1199 = vld [vmem:[%s4] sm:$0xff]
    %1200 = vset.pattern.permute.xlu0 0
    %1201 = vperm.xlu0 %1200, %v1199
    %v1202 = vpop.permute.xlu0 %1201
    %vm1203 = vcmp.eq.s32.totalorder %v1197, %v1202
    %vm1204 = vcmp.eq.s32.totalorder %v1198, %v1202
    %v1205 = vsel %vm1203, %v1194, %v1160
    %v1206 = vsel %vm1204, %v1195, %v1161
    %v1207 = vmul.f32 %v1205, 30.0
    %v1208 = vmul.f32 %v1206, 30.0
    %1209 = vst [vmem:[#allocation6] sm:$0xff] %v1207
    %vm1210 = vcmask 556032
    %1211 = vst.msk [vmem:[#allocation6 + $0x8] sm:$0xff] %vm1210, %v1208
    // Predicated region
    $region26: #{tpu_custom_call.1} parent=1 // pred_check
      _
    $region27: #{tpu_custom_call.1} parent=1 // pred_check_branch
      %1213 = sbr.rel (0) target = $region29
    $region28: #{tpu_custom_call.1} parent=1 // pred_region
      %s1215 = ssub.s32 256, 256
      %1216 = vsyncadd [#allocation5], %s1215
      %s1218 = sshll.u32 [#allocation6], 4
      %s1219 = int_to_ptr.vmem [resolvable:$true] %s1218
      %1221 = dma.vmem_to_hbm [thread:$0]  %s1219, 256, %s5, [#allocation5]
    $region29: #{tpu_custom_call.1} parent=1 // pred_fallthru
      _
    // Predicated region
    $region30: #{tpu_custom_call.1} parent=1 // pred_check
      _
    $region31: #{tpu_custom_call.1} parent=1 // pred_check_branch
      %1223 = sbr.rel (0) target = $region33
    $region32: #{tpu_custom_call.1} parent=1 // pred_region
      %1224 = dma.done [#allocation5], 256
    $region33: #{tpu_custom_call.1} parent=1 // pred_fallthru
      _
    %1225 = vsyncpa [#allocation4], 1
    %1226 = vsyncpa [#allocation5], 1

</llo_original>
